<compile_context>
chip_gen: v7x
topology: tpu7x:2x2x1
jax: 0.10.0
libtpu: 0.0.40
codegen_flags: <defaults>
</compile_context>

<pallas_src>
import jax
import jax.numpy as jnp
from jax.experimental import pallas as pl
from jax.experimental.pallas import tpu as pltpu


def _kl_kernel(mu_ref, logvar_ref, w_ref, out_ref, acc_ref):
    """One row-tile: accumulate sum_{r,d} (mu^2 + exp(lv) - lv - 1) * w[r]."""
    i = pl.program_id(0)

    @pl.when(i == 0)
    def _init():
        acc_ref[...] = jnp.zeros_like(acc_ref)

    # Cast to f32 in-kernel (inputs may be streamed as bf16).
    mu = mu_ref[...].astype(jnp.float32)        # (TB, D)
    lv = logvar_ref[...].astype(jnp.float32)    # (TB, D)
    w = w_ref[...]                              # (TB, 1) f32, pre-scaled mask

    # 2 * kl_elem = mu^2 + exp(logvar) - logvar - 1 ; the 0.5, 1/D and 1/den
    # factors are already folded into w on the host side.
    term = mu * mu + jnp.exp(lv) - lv - 1.0
    acc_ref[...] = acc_ref[...] + jnp.sum(term * w)

    @pl.when(i == pl.num_programs(0) - 1)
    def _finalize():
        out_ref[...] = acc_ref[...]


def _choose_tile_rows(batch, dim, itemsize):
    """~2 MiB per input tile (2 inputs x 2 pipeline buffers stays well inside
    even v7x's scoped VMEM), multiple of 8 sublanes, at least 8 rows."""
    target_bytes = 2 * 1024 * 1024
    tb = min(batch, max(1, target_bytes // max(1, dim * itemsize)))
    tb = (tb // 8) * 8
    return max(8, tb)


def kl_div_loss(mu, logvar, label_ids=None, mask_key=0, tile_rows=None):
    """Mirrors KLDivLoss.forward.

    Returns a scalar jnp array, or None if label_ids is given and no entry
    equals mask_key (matching the PyTorch module).

    NOTE: label_ids (like in the PyTorch module, which builds a Python list of
    indices) must be concrete host data — the "return None" branch is a
    host-side decision and is not jit-traceable.
    """
    assert mu.shape == logvar.shape and mu.ndim == 2
    B, D = mu.shape

    if label_ids is not None:
        label_ids = jnp.asarray(label_ids)
        sel = (label_ids == mask_key)
        n_sel = int(jnp.sum(sel))           # host sync; label_ids is concrete
        if n_sel == 0:
            return None
        mask = sel.astype(jnp.float32)
        den = float(n_sel)
    else:
        mask = jnp.ones((B,), dtype=jnp.float32)
        den = float(B)

    # Fold 1/2 (KL factor), 1/D (mean over latent dim) and 1/den (mean over
    # selected rows) into a per-row weight; kernel only does sum(term * w).
    scale = 0.5 / (float(D) * den)
    w = (mask * scale).reshape(B, 1).astype(jnp.float32)

    itemsize = jnp.dtype(mu.dtype).itemsize
    tb = tile_rows if tile_rows is not None else _choose_tile_rows(B, D, itemsize)
    tb = max(8, (tb // 8) * 8)
    num_tiles = -(-B // tb)
    b_pad = num_tiles * tb

    if b_pad != B:
        # Explicit zero padding: padded rows carry weight 0 and well-defined
        # mu/logvar (avoids exp(garbage) * 0 -> NaN from OOB block padding).
        pad = b_pad - B
        mu = jnp.pad(mu, ((0, pad), (0, 0)))
        logvar = jnp.pad(logvar, ((0, pad), (0, 0)))
        w = jnp.pad(w, ((0, pad), (0, 0)))

    cost = pl.CostEstimate(
        flops=6 * b_pad * D,
        transcendentals=b_pad * D,
        bytes_accessed=2 * b_pad * D * itemsize + b_pad * 4 + 4,
    )

    out = pl.pallas_call(
        _kl_kernel,
        out_shape=jax.ShapeDtypeStruct((1, 1), jnp.float32),
        grid=(num_tiles,),
        in_specs=[
            pl.BlockSpec((tb, D), lambda i: (i, 0)),
            pl.BlockSpec((tb, D), lambda i: (i, 0)),
            pl.BlockSpec((tb, 1), lambda i: (i, 0)),
        ],
        # Same block every step => output stays resident across the grid axis;
        # it is only written at the final step by the kernel.
        out_specs=pl.BlockSpec((1, 1), lambda i: (0, 0)),
        scratch_shapes=[pltpu.VMEM((1, 1), jnp.float32)],
        compiler_params=pltpu.CompilerParams(
            dimension_semantics=("arbitrary",)),
        cost_estimate=cost,
    )(mu, logvar, w)
    return out[0, 0]


def _reference(mu, logvar, label_ids=None, mask_key=0):
    mu = mu.astype(jnp.float32)
    logvar = logvar.astype(jnp.float32)
    kl = -(1.0 + logvar - mu ** 2 - jnp.exp(logvar)) / 2.0
    if label_ids is not None:
        idx = [k for k, v in enumerate(list(label_ids)) if int(v) == mask_key]
        if len(idx) == 0:
            return None
        kl = kl[jnp.asarray(idx)]
    return jnp.mean(jnp.mean(kl, axis=1))


if __name__ == "__main__":
    key = jax.random.PRNGKey(0)
    k1, k2, k3, k4 = jax.random.split(key, 4)

    # case 1: small f32 inputs with label filtering (B=8, D=32)
    B, D = 8, 32
    mu = jax.random.normal(k1, (B, D), dtype=jnp.float32)
    logvar = 0.1 * jax.random.normal(k2, (B, D), dtype=jnp.float32)
    label_ids = jnp.array([0, 1, 0, 0, 1, 0, 1, 0], dtype=jnp.int32)

    loss1 = kl_div_loss(mu, logvar, label_ids=label_ids, mask_key=0)
    jax.block_until_ready(loss1)
    ref1 = _reference(mu, logvar, label_ids=label_ids, mask_key=0)
    assert jnp.allclose(loss1, ref1, rtol=1e-5, atol=1e-5), (loss1, ref1)

    # case 2: no label_ids (plain mean over all rows)
    loss2 = kl_div_loss(mu, logvar)
    jax.block_until_ready(loss2)
    ref2 = _reference(mu, logvar)
    assert jnp.allclose(loss2, ref2, rtol=1e-5, atol=1e-5), (loss2, ref2)

    # case 3: multi-tile accumulation path + bf16 streaming (B=32, tile_rows=8)
    B3 = 32
    mu3 = jax.random.normal(k3, (B3, D), dtype=jnp.float32).astype(jnp.bfloat16)
    logvar3 = (0.1 * jax.random.normal(k4, (B3, D), dtype=jnp.float32)).astype(jnp.bfloat16)
    labels3 = jnp.array([i % 3 for i in range(B3)], dtype=jnp.int32)

    loss3 = kl_div_loss(mu3, logvar3, label_ids=labels3, mask_key=0, tile_rows=8)
    jax.block_until_ready(loss3)
    ref3 = _reference(mu3, logvar3, label_ids=labels3, mask_key=0)
    assert jnp.allclose(loss3, ref3, rtol=1e-4, atol=1e-4), (loss3, ref3)

    # case 4: non-divisible batch -> explicit zero padding path (B=13)
    B4 = 13
    mu4 = jax.random.normal(k1, (B4, D), dtype=jnp.float32)
    logvar4 = 0.1 * jax.random.normal(k2, (B4, D), dtype=jnp.float32)
    loss4 = kl_div_loss(mu4, logvar4)
    jax.block_until_ready(loss4)
    ref4 = _reference(mu4, logvar4)
    assert jnp.allclose(loss4, ref4, rtol=1e-5, atol=1e-5), (loss4, ref4)

    # case 5: no selected rows -> None (matches PyTorch)
    loss5 = kl_div_loss(mu, logvar, label_ids=jnp.ones((B,), jnp.int32), mask_key=0)
    assert loss5 is None

    print("KERNEL_OK")
</pallas_src>

<mosaic_0001>
module attributes {stable_mosaic.version = 11 : i64} {
  func.func @_kl_kernel(%arg0: i32, %arg1: memref<8x32xf32, #tpu.memory_space<vmem>>, %arg2: memref<8x32xf32, #tpu.memory_space<vmem>>, %arg3: memref<8x1xf32, #tpu.memory_space<vmem>>, %arg4: memref<1x1xf32, #tpu.memory_space<vmem>>, %arg5: memref<1x1xf32, #tpu.memory_space<vmem>>) attributes {dimension_semantics = [#tpu.dimension_semantics<arbitrary>], iteration_bounds = array<i64: 1>, scalar_prefetch = 0 : i64, scratch_operands = 1 : i64, tpu.core_type = #tpu.core_type<tc>, window_params = [{transform_indices = @transform_0, window_bounds = array<i64: 8, 32>}, {transform_indices = @transform_1, window_bounds = array<i64: 8, 32>}, {transform_indices = @transform_2, window_bounds = array<i64: 8, 1>}, {pipeline_mode = #tpu.pipeline_mode<synchronous>, transform_indices = @transform_3, window_bounds = array<i64: 1, 1>}]} {
    %c0_i32 = arith.constant 0 : i32
    %0 = arith.cmpi eq, %arg0, %c0_i32 : i32
    %1 = arith.extui %0 : i1 to i32
    %c0_i32_0 = arith.constant 0 : i32
    %2 = arith.cmpi ne, %1, %c0_i32_0 : i32
    scf.if %2 {
      %cst_13 = arith.constant 0.000000e+00 : f32
      %25 = vector.broadcast %cst_13 : f32 to vector<1x1xf32>
      %c0_14 = arith.constant 0 : index
      %c0_15 = arith.constant 0 : index
      %26 = vector.load %arg5[%c0_14, %c0_15] : memref<1x1xf32, #tpu.memory_space<vmem>>, vector<1x1xf32>
      tpu.vector_store %arg5[%c0_14, %c0_15], %25 {strides = array<i32>} : memref<1x1xf32, #tpu.memory_space<vmem>>, vector<1x1xf32>,
    } else {
    }
    %c0 = arith.constant 0 : index
    %c0_1 = arith.constant 0 : index
    %3 = vector.load %arg1[%c0, %c0_1] : memref<8x32xf32, #tpu.memory_space<vmem>>, vector<8x32xf32>
    %c0_2 = arith.constant 0 : index
    %c0_3 = arith.constant 0 : index
    %4 = vector.load %arg2[%c0_2, %c0_3] : memref<8x32xf32, #tpu.memory_space<vmem>>, vector<8x32xf32>
    %c0_4 = arith.constant 0 : index
    %c0_5 = arith.constant 0 : index
    %5 = vector.load %arg3[%c0_4, %c0_5] : memref<8x1xf32, #tpu.memory_space<vmem>>, vector<8x1xf32>
    %6 = arith.mulf %3, %3 : vector<8x32xf32>
    %7 = math.exp %4 : vector<8x32xf32>
    %8 = arith.addf %6, %7 : vector<8x32xf32>
    %9 = arith.subf %8, %4 : vector<8x32xf32>
    %cst = arith.constant 1.000000e+00 : f32
    %10 = vector.broadcast %cst : f32 to vector<8x32xf32>
    %11 = arith.subf %9, %10 : vector<8x32xf32>
    %c0_6 = arith.constant 0 : index
    %c0_7 = arith.constant 0 : index
    %12 = vector.load %arg5[%c0_6, %c0_7] : memref<1x1xf32, #tpu.memory_space<vmem>>, vector<1x1xf32>
    %13 = vector.broadcast %5 : vector<8x1xf32> to vector<8x32xf32>
    %14 = arith.mulf %11, %13 : vector<8x32xf32>
    %15 = vector.shape_cast %14 : vector<8x32xf32> to vector<1x8x32xf32>
    %cst_8 = arith.constant dense<0.000000e+00> : vector<1xf32>
    %16 = vector.multi_reduction <add>, %15, %cst_8 [1, 2] : vector<1x8x32xf32> to vector<1xf32>
    %17 = vector.shape_cast %16 : vector<1xf32> to vector<1x1x1xf32>
    %18 = vector.extract %17[0, 0, 0] : f32 from vector<1x1x1xf32>
    %19 = vector.broadcast %18 : f32 to vector<1x1xf32>
    %20 = arith.addf %12, %19 : vector<1x1xf32>
    %c0_9 = arith.constant 0 : index
    %c0_10 = arith.constant 0 : index
    %21 = vector.load %arg5[%c0_9, %c0_10] : memref<1x1xf32, #tpu.memory_space<vmem>>, vector<1x1xf32>
    tpu.vector_store %arg5[%c0_9, %c0_10], %20 {strides = array<i32>} : memref<1x1xf32, #tpu.memory_space<vmem>>, vector<1x1xf32>,
    %c0_i32_11 = arith.constant 0 : i32
    %22 = arith.cmpi eq, %arg0, %c0_i32_11 : i32
    %23 = arith.extui %22 : i1 to i32
    %c0_i32_12 = arith.constant 0 : i32
    %24 = arith.cmpi ne, %23, %c0_i32_12 : i32
    scf.if %24 {
      %c0_13 = arith.constant 0 : index
      %c0_14 = arith.constant 0 : index
      %25 = vector.load %arg5[%c0_13, %c0_14] : memref<1x1xf32, #tpu.memory_space<vmem>>, vector<1x1xf32>
      %c0_15 = arith.constant 0 : index
      %c0_16 = arith.constant 0 : index
      %26 = vector.load %arg4[%c0_15, %c0_16] : memref<1x1xf32, #tpu.memory_space<vmem>>, vector<1x1xf32>
      tpu.vector_store %arg4[%c0_15, %c0_16], %25 {strides = array<i32>} : memref<1x1xf32, #tpu.memory_space<vmem>>, vector<1x1xf32>,
    } else {
    }
    return
  }
  func.func @transform_0(%arg0: i32) -> (i32, i32) {
    %c0_i32 = arith.constant 0 : i32
    %c0_i32_0 = arith.constant 0 : i32
    return %arg0, %c0_i32 : i32, i32
  }
  func.func @transform_1(%arg0: i32) -> (i32, i32) {
    %c0_i32 = arith.constant 0 : i32
    %c0_i32_0 = arith.constant 0 : i32
    return %arg0, %c0_i32 : i32, i32
  }
  func.func @transform_2(%arg0: i32) -> (i32, i32) {
    %c0_i32 = arith.constant 0 : i32
    %c0_i32_0 = arith.constant 0 : i32
    return %arg0, %c0_i32 : i32, i32
  }
  func.func @transform_3(%arg0: i32) -> (i32, i32) {
    %c0_i32 = arith.constant 0 : i32
    %c0_i32_0 = arith.constant 0 : i32
    %c0_i32_1 = arith.constant 0 : i32
    return %c0_i32, %c0_i32_0 : i32, i32
  }
}

</mosaic_0001>

<llo_original>
// kernel: tpu_custom_call.1
$region0: #{tpu_custom_call.1}
  #allocation0 [shape = 'u32[]', space=smem, size = 0x4, offset = 0x4, fixed_abs, tag = 'smem constant byte address 0x4 - core index']
  #allocation1 [shape = 'u32[144,128]{1,0:T(1,128)}', space=vmem, size = 0x12000, scoped, tag = 'internal scratch']
  #allocation2 [shape = 'f32[1,1]{1,0:T(1,128)}', space=vmem, size = 0x200, scoped, tag = 'scratch operand']
  %s0 = inlined_call_operand.vmem [shape: f32[8,32], index: 0, kind: input, shape index: {}]
  %s1 = inlined_call_operand.hbm [shape: f32[8,32], index: 1, kind: input, shape index: {}]
  %s2 = inlined_call_operand.vmem [shape: f32[8,1], index: 2, kind: input, shape index: {}]
  %s3 = inlined_call_operand.hbm [shape: f32[1,1], index: 3, kind: output, shape index: {}]
  %s4 = sld [smem:[#allocation0]]
  $region34: #{tpu_custom_call.1} parent=0
    _
  %s6 = ssub.s32 1, %s4
  %s7 = scalar_select 0, %s6, %s4
  $region1: #{tpu_custom_call.1} parent=0
    #allocation3 [shape = 'u8[4096]{0}', space=vmem, size = 0x1000, scoped, tag = 'input window, operand 1, single buffered']
    #allocation4 [shape = 's32[1]{0}', space=sflag, size = 0x4, scoped, tag = 'scoped memory for tpu_custom_call.1']
    #allocation5 [shape = 's32[1]{0}', space=sflag, size = 0x4, scoped, tag = 'scoped memory for tpu_custom_call.1']
    #allocation6 [shape = 'u8[512]{0}', space=vmem, size = 0x400, scoped, tag = 'output window, operand 0, single buffered']
    %8 = vsyncpa [#allocation4], 0
    %9 = vsyncpa [#allocation5], 0
    // Predicated region
    $region2: #{tpu_custom_call.1} parent=1 // pred_check
      _
    $region3: #{tpu_custom_call.1} parent=1 // pred_check_branch
      %11 = sbr.rel (0) target = $region5
    $region4: #{tpu_custom_call.1} parent=1 // pred_region
      _
    $region5: #{tpu_custom_call.1} parent=1 // pred_fallthru
      _
    // Predicated region
    $region6: #{tpu_custom_call.1} parent=1 // pred_check
      _
    $region7: #{tpu_custom_call.1} parent=1 // pred_check_branch
      %13 = sbr.rel (0) target = $region9
    $region8: #{tpu_custom_call.1} parent=1 // pred_region
      %s15 = ssub.s32 128, 128
      %16 = vsyncadd [#allocation4], %s15
      %s18 = sshll.u32 [#allocation3], 4
      %s19 = int_to_ptr.vmem [resolvable:$true] %s18
      %21 = dma.hbm_to_vmem [thread:$0]  %s1, 128, %s19, [#allocation4]
    $region9: #{tpu_custom_call.1} parent=1 // pred_fallthru
      _
    // Predicated region
    $region10: #{tpu_custom_call.1} parent=1 // pred_check
      _
    $region11: #{tpu_custom_call.1} parent=1 // pred_check_branch
      %23 = sbr.rel (0) target = $region13
    $region12: #{tpu_custom_call.1} parent=1 // pred_region
      _
    $region13: #{tpu_custom_call.1} parent=1 // pred_fallthru
      _
    // Predicated region
    $region14: #{tpu_custom_call.1} parent=1 // pred_check
      _
    $region15: #{tpu_custom_call.1} parent=1 // pred_check_branch
      %25 = sbr.rel (0) target = $region17
    $region16: #{tpu_custom_call.1} parent=1 // pred_region
      %26 = dma.done [#allocation4], 128
    $region17: #{tpu_custom_call.1} parent=1 // pred_fallthru
      _
    %p27 = scmp.eq.s32.totalorder 0, 0
    // Predicated region
    $region18: #{tpu_custom_call.1} parent=1 // pred_check
      %p28 = pneg %p27
    $region19: #{tpu_custom_call.1} parent=1 // pred_check_branch
      %30 = sbr.rel (%p28) target = $region21
    $region20: #{tpu_custom_call.1} parent=1 // pred_region
      %vm31 = vcmask 0
      %32 = vst.msk [vmem:[#allocation2] sm:$0x1] %vm31, 0.0
    $region21: #{tpu_custom_call.1} parent=1 // pred_fallthru
      _
    %v33 = vld [vmem:[%s0] sm:$0xff]
    %v34 = vld [vmem:[#allocation3] sm:$0xff]
    %v35 = vld [vmem:[%s2] sm:$0xff]
    %v36 = vmul.f32 %v33, %v33
    %v37 = vmul.f32 %v34, 1.442695
    %v38 = vpow.pop %v37
    %v39 = vadd.f32 %v36, %v38
    %v40 = vsub.f32 %v39, %v34
    %v41 = vsub.f32 %v40, 1.0
    %v42 = vld [vmem:[#allocation2] sm:$0x1]
    %44 = vset.pattern.permute.xlu0 0
    %45 = vperm.xlu0 %44, %v35
    %v46 = vpop.permute.xlu0 %45
    %v48 = vmul.f32 %v41, %v46
    %vm49 = vcmask 261120
    %v50 = vsel %vm49, %v48, 0.0
    %51 = vadd.xlane.f32.xlu0 %v50
    %v52 = vpop.xlane.xlu0 %51
    %v53 = vrot.slane %v52, 4
    %v54 = vadd.f32 %v52, %v53
    %v55 = vrot.slane %v54, 2
    %v56 = vadd.f32 %v54, %v55
    %v57 = vrot.slane %v56, 1
    %v58 = vadd.f32 %v56, %v57
    %s59 = vtos %v58
    %v60 = vstv %s59
    %v61 = vadd.f32 %v42, %v60
    %vm62 = vcmask 0
    %63 = vst.msk [vmem:[#allocation2] sm:$0x1] %vm62, %v61
    // Predicated region
    $region22: #{tpu_custom_call.1} parent=1 // pred_check
      %p64 = pneg %p27
    $region23: #{tpu_custom_call.1} parent=1 // pred_check_branch
      %66 = sbr.rel (%p64) target = $region25
    $region24: #{tpu_custom_call.1} parent=1 // pred_region
      %v67 = vld [vmem:[#allocation2] sm:$0x1]
      %68 = vst.msk [vmem:[#allocation6] sm:$0x1] %vm62, %v67
    $region25: #{tpu_custom_call.1} parent=1 // pred_fallthru
      _
    // Predicated region
    $region26: #{tpu_custom_call.1} parent=1 // pred_check
      _
    $region27: #{tpu_custom_call.1} parent=1 // pred_check_branch
      %70 = sbr.rel (0) target = $region29
    $region28: #{tpu_custom_call.1} parent=1 // pred_region
      %s72 = ssub.s32 16, 16
      %73 = vsyncadd [#allocation5], %s72
      %s75 = sshll.u32 [#allocation6], 4
      %s76 = int_to_ptr.vmem [resolvable:$true] %s75
      %78 = dma.vmem_to_hbm [thread:$0]  %s76, 16, %s3, [#allocation5]
    $region29: #{tpu_custom_call.1} parent=1 // pred_fallthru
      _
    // Predicated region
    $region30: #{tpu_custom_call.1} parent=1 // pred_check
      _
    $region31: #{tpu_custom_call.1} parent=1 // pred_check_branch
      %80 = sbr.rel (0) target = $region33
    $region32: #{tpu_custom_call.1} parent=1 // pred_region
      %81 = dma.done [#allocation5], 16
    $region33: #{tpu_custom_call.1} parent=1 // pred_fallthru
      _
    %82 = vsyncpa [#allocation4], 1
    %83 = vsyncpa [#allocation5], 1

</llo_original>
